<compile_context>
chip_gen: v7x
topology: tpu7x:2x2x1
jax: 0.10.0
libtpu: 0.0.40
codegen_flags: <defaults>
</compile_context>

<pallas_src>
import jax
import jax.numpy as jnp
import numpy as np
from jax.experimental import pallas as pl
from jax.experimental.pallas import tpu as pltpu

EPS = 1e-5
NEG_SLOPE = 0.01  # PyTorch LeakyReLU default


def _conv_stats_kernel(x_ref, w_ref, sum_ref, sq_ref):
    """Pass 1: conv tile (single K=9*Cin matmul) + per-channel sum / sum-sq.

    x_ref: (TM, 9*Cin) im2col row tile
    w_ref: (9*Cin, Cout) packed conv weights (grid-resident)
    sum_ref, sq_ref: (1, Cout) grid-resident accumulators (same block every step)
    """
    @pl.when(pl.program_id(0) == 0)
    def _():
        sum_ref[...] = jnp.zeros_like(sum_ref)
        sq_ref[...] = jnp.zeros_like(sq_ref)

    y = jnp.dot(x_ref[...], w_ref[...], preferred_element_type=jnp.float32)
    sum_ref[...] = sum_ref[...] + jnp.sum(y, axis=0, keepdims=True)
    sq_ref[...] = sq_ref[...] + jnp.sum(y * y, axis=0, keepdims=True)


def _conv_bn_lrelu_kernel(x_ref, w_ref, scale_ref, shift_ref, o_ref):
    """Pass 2: recompute conv tile, apply folded BN scale/shift + LeakyReLU."""
    y = jnp.dot(x_ref[...], w_ref[...], preferred_element_type=jnp.float32)
    y = y * scale_ref[...] + shift_ref[...]        # (1,Cout) broadcasts over rows
    o_ref[...] = jnp.where(y >= 0.0, y, NEG_SLOPE * y)


def block_forward(x_nchw, w_oihw, bias, gamma, beta, *, tm=512):
    """Forward of Block. x_nchw: (N, Cin, H, W) float32. Returns (N, Cout, H, W)."""
    # Conv bias cancels exactly under training-mode BN mean subtraction -> dead work.
    del bias

    n, cin, h, w = x_nchw.shape
    cout = w_oihw.shape[0]
    m = n * h * w
    kdim = 9 * cin

    tm = max(8, (tm // 8) * 8)          # sublane-aligned row tile
    num_tiles = pl.cdiv(m, tm)
    m_pad = num_tiles * tm

    # --- glue: NCHW -> NHWC, zero-pad, single (M, 9*Cin) im2col ---
    # (tap-major, Cin-minor feature order; matches the weight reshape below)
    x_nhwc = jnp.transpose(x_nchw, (0, 2, 3, 1)).astype(jnp.float32)
    xp = jnp.pad(x_nhwc, ((0, 0), (1, 1), (1, 1), (0, 0)))
    taps = [xp[:, ky:ky + h, kx:kx + w, :] for ky in range(3) for kx in range(3)]
    x_im2col = jnp.concatenate(taps, axis=-1).reshape(m, kdim)
    if m_pad > m:
        # Zero rows produce exactly-zero conv output (no bias), so they are
        # harmless in the stats accumulation and are sliced off after pass 2.
        x_im2col = jnp.pad(x_im2col, ((0, m_pad - m), (0, 0)))

    # Conv weight (Cout, Cin, 3, 3) -> (kh, kw, Cin, Cout) -> (9*Cin, Cout)
    w_mat = jnp.transpose(w_oihw, (2, 3, 1, 0)).reshape(kdim, cout).astype(jnp.float32)

    x_spec = pl.BlockSpec((tm, kdim), lambda i: (i, 0))
    w_spec = pl.BlockSpec((kdim, cout), lambda i: (0, 0))
    vec_spec = pl.BlockSpec((1, cout), lambda i: (0, 0))

    # ---- pass 1: per-channel sum / sum-of-squares of the conv output ----
    ssum, ssq = pl.pallas_call(
        _conv_stats_kernel,
        grid=(num_tiles,),
        in_specs=[x_spec, w_spec],
        out_specs=(vec_spec, vec_spec),
        out_shape=(jax.ShapeDtypeStruct((1, cout), jnp.float32),
                   jax.ShapeDtypeStruct((1, cout), jnp.float32)),
        compiler_params=pltpu.CompilerParams(
            dimension_semantics=("arbitrary",),        # grid-resident accumulator
            vmem_limit_bytes=32 * 1024 * 1024),
    )(x_im2col, w_mat)

    # Fold training-mode BN (biased variance, eps=1e-5) into scale/shift (tiny op).
    mean = ssum / m
    var = ssq / m - mean * mean
    scale = gamma.reshape(1, cout).astype(jnp.float32) * jax.lax.rsqrt(var + EPS)
    shift = beta.reshape(1, cout).astype(jnp.float32) - mean * scale

    # ---- pass 2: recompute conv per tile + scale/shift + LeakyReLU ----
    out_flat = pl.pallas_call(
        _conv_bn_lrelu_kernel,
        grid=(num_tiles,),
        in_specs=[x_spec, w_spec, vec_spec, vec_spec],
        out_specs=pl.BlockSpec((tm, cout), lambda i: (i, 0)),
        out_shape=jax.ShapeDtypeStruct((m_pad, cout), jnp.float32),
        compiler_params=pltpu.CompilerParams(
            dimension_semantics=("parallel",),         # megacore-shardable on v7x
            vmem_limit_bytes=32 * 1024 * 1024),
    )(x_im2col, w_mat, scale, shift)

    # glue: (M, Cout) -> (N, H, W, Cout) -> NCHW
    out = out_flat[:m].reshape(n, h, w, cout)
    return jnp.transpose(out, (0, 3, 1, 2))


def block_reference(x_nchw, w_oihw, bias, gamma, beta):
    """Pure-JAX reference mirroring PyTorch semantics (training-mode BN)."""
    y = jax.lax.conv_general_dilated(
        x_nchw.astype(jnp.float32),
        w_oihw.astype(jnp.float32),
        window_strides=(1, 1),
        padding=((1, 1), (1, 1)),
        dimension_numbers=("NCHW", "OIHW", "NCHW"),
    ) + bias.reshape(1, -1, 1, 1)
    mean = jnp.mean(y, axis=(0, 2, 3), keepdims=True)
    var = jnp.mean((y - mean) ** 2, axis=(0, 2, 3), keepdims=True)
    y = (y - mean) / jnp.sqrt(var + EPS)
    y = y * gamma.reshape(1, -1, 1, 1) + beta.reshape(1, -1, 1, 1)
    return jnp.where(y >= 0.0, y, NEG_SLOPE * y)


if __name__ == "__main__":
    # Small shapes consistent with the module: Block(in_f=4, out_f=8), x NCHW.
    N, CIN, COUT, H, W = 2, 4, 8, 16, 16

    key = jax.random.PRNGKey(0)
    kx, kw, kb, kg, kbe = jax.random.split(key, 5)

    x = jax.random.normal(kx, (N, CIN, H, W), dtype=jnp.float32)
    # Conv2d params (torch layout OIHW), deterministic synthetic init.
    w_conv = jax.random.normal(kw, (COUT, CIN, 3, 3), dtype=jnp.float32) * 0.1
    b_conv = jax.random.normal(kb, (COUT,), dtype=jnp.float32) * 0.1
    # BatchNorm2d affine params (perturbed from the torch defaults so the
    # affine path is exercised but still deterministic).
    gamma = 1.0 + 0.1 * jax.random.normal(kg, (COUT,), dtype=jnp.float32)
    beta = 0.1 * jax.random.normal(kbe, (COUT,), dtype=jnp.float32)

    # tm=128 -> 4 grid steps over M = N*H*W = 512 rows, exercising the
    # pipelined grid and the grid-resident stats accumulator.
    out = block_forward(x, w_conv, b_conv, gamma, beta, tm=128)
    out = jax.block_until_ready(out)

    ref = jax.block_until_ready(block_reference(x, w_conv, b_conv, gamma, beta))
    np.testing.assert_allclose(np.asarray(out), np.asarray(ref), rtol=1e-4, atol=1e-4)
    assert out.shape == (N, COUT, H, W)

    print("KERNEL_OK")
</pallas_src>

<mosaic_0001>
module attributes {stable_mosaic.version = 11 : i64} {
  func.func @_conv_stats_kernel(%arg0: i32, %arg1: memref<128x36xf32, #tpu.memory_space<vmem>>, %arg2: memref<36x8xf32, #tpu.memory_space<vmem>>, %arg3: memref<1x8xf32, #tpu.memory_space<vmem>>, %arg4: memref<1x8xf32, #tpu.memory_space<vmem>>) attributes {dimension_semantics = [#tpu.dimension_semantics<arbitrary>], iteration_bounds = array<i64: 4>, scalar_prefetch = 0 : i64, scratch_operands = 0 : i64, tpu.core_type = #tpu.core_type<tc>, window_params = [{transform_indices = @transform_0, window_bounds = array<i64: 128, 36>}, {pipeline_mode = #tpu.pipeline_mode<synchronous>, transform_indices = @transform_1, window_bounds = array<i64: 36, 8>}, {pipeline_mode = #tpu.pipeline_mode<synchronous>, transform_indices = @transform_2, window_bounds = array<i64: 1, 8>}, {pipeline_mode = #tpu.pipeline_mode<synchronous>, transform_indices = @transform_3, window_bounds = array<i64: 1, 8>}]} {
    %c0_i32 = arith.constant 0 : i32
    %0 = arith.cmpi eq, %arg0, %c0_i32 : i32
    %1 = arith.extui %0 : i1 to i32
    %c0_i32_0 = arith.constant 0 : i32
    %2 = arith.cmpi ne, %1, %c0_i32_0 : i32
    scf.if %2 {
      %cst_14 = arith.constant 0.000000e+00 : f32
      %17 = vector.broadcast %cst_14 : f32 to vector<1x8xf32>
      %c0_15 = arith.constant 0 : index
      %c0_16 = arith.constant 0 : index
      %18 = vector.load %arg3[%c0_15, %c0_16] : memref<1x8xf32, #tpu.memory_space<vmem>>, vector<1x8xf32>
      tpu.vector_store %arg3[%c0_15, %c0_16], %17 {strides = array<i32>} : memref<1x8xf32, #tpu.memory_space<vmem>>, vector<1x8xf32>,
      %cst_17 = arith.constant 0.000000e+00 : f32
      %19 = vector.broadcast %cst_17 : f32 to vector<1x8xf32>
      %c0_18 = arith.constant 0 : index
      %c0_19 = arith.constant 0 : index
      %20 = vector.load %arg4[%c0_18, %c0_19] : memref<1x8xf32, #tpu.memory_space<vmem>>, vector<1x8xf32>
      tpu.vector_store %arg4[%c0_18, %c0_19], %19 {strides = array<i32>} : memref<1x8xf32, #tpu.memory_space<vmem>>, vector<1x8xf32>,
    } else {
    }
    %c0 = arith.constant 0 : index
    %c0_1 = arith.constant 0 : index
    %3 = vector.load %arg1[%c0, %c0_1] : memref<128x36xf32, #tpu.memory_space<vmem>>, vector<128x36xf32>
    %c0_2 = arith.constant 0 : index
    %c0_3 = arith.constant 0 : index
    %4 = vector.load %arg2[%c0_2, %c0_3] : memref<36x8xf32, #tpu.memory_space<vmem>>, vector<36x8xf32>
    %cst = arith.constant dense<0.000000e+00> : vector<128x8xf32>
    %5 = tpu.matmul %3, %4, %cst {dimension_numbers = #tpu.dot_dimension_numbers<[1], [0], [0], [1], [0, 0, 1, 1], [], []>} : vector<128x36xf32>, vector<36x8xf32>, vector<128x8xf32> -> vector<128x8xf32>
    %c0_4 = arith.constant 0 : index
    %c0_5 = arith.constant 0 : index
    %6 = vector.load %arg3[%c0_4, %c0_5] : memref<1x8xf32, #tpu.memory_space<vmem>>, vector<1x8xf32>
    %cst_6 = arith.constant dense<0.000000e+00> : vector<8xf32>
    %7 = vector.multi_reduction <add>, %5, %cst_6 [0] : vector<128x8xf32> to vector<8xf32>
    %8 = vector.shape_cast %7 : vector<8xf32> to vector<1x8xf32>
    %9 = arith.addf %6, %8 : vector<1x8xf32>
    %c0_7 = arith.constant 0 : index
    %c0_8 = arith.constant 0 : index
    %10 = vector.load %arg3[%c0_7, %c0_8] : memref<1x8xf32, #tpu.memory_space<vmem>>, vector<1x8xf32>
    tpu.vector_store %arg3[%c0_7, %c0_8], %9 {strides = array<i32>} : memref<1x8xf32, #tpu.memory_space<vmem>>, vector<1x8xf32>,
    %c0_9 = arith.constant 0 : index
    %c0_10 = arith.constant 0 : index
    %11 = vector.load %arg4[%c0_9, %c0_10] : memref<1x8xf32, #tpu.memory_space<vmem>>, vector<1x8xf32>
    %12 = arith.mulf %5, %5 : vector<128x8xf32>
    %cst_11 = arith.constant dense<0.000000e+00> : vector<8xf32>
    %13 = vector.multi_reduction <add>, %12, %cst_11 [0] : vector<128x8xf32> to vector<8xf32>
    %14 = vector.shape_cast %13 : vector<8xf32> to vector<1x8xf32>
    %15 = arith.addf %11, %14 : vector<1x8xf32>
    %c0_12 = arith.constant 0 : index
    %c0_13 = arith.constant 0 : index
    %16 = vector.load %arg4[%c0_12, %c0_13] : memref<1x8xf32, #tpu.memory_space<vmem>>, vector<1x8xf32>
    tpu.vector_store %arg4[%c0_12, %c0_13], %15 {strides = array<i32>} : memref<1x8xf32, #tpu.memory_space<vmem>>, vector<1x8xf32>,
    return
  }
  func.func @transform_0(%arg0: i32) -> (i32, i32) {
    %c0_i32 = arith.constant 0 : i32
    %c0_i32_0 = arith.constant 0 : i32
    return %arg0, %c0_i32 : i32, i32
  }
  func.func @transform_1(%arg0: i32) -> (i32, i32) {
    %c0_i32 = arith.constant 0 : i32
    %c0_i32_0 = arith.constant 0 : i32
    %c0_i32_1 = arith.constant 0 : i32
    return %c0_i32, %c0_i32_0 : i32, i32
  }
  func.func @transform_2(%arg0: i32) -> (i32, i32) {
    %c0_i32 = arith.constant 0 : i32
    %c0_i32_0 = arith.constant 0 : i32
    %c0_i32_1 = arith.constant 0 : i32
    return %c0_i32, %c0_i32_0 : i32, i32
  }
  func.func @transform_3(%arg0: i32) -> (i32, i32) {
    %c0_i32 = arith.constant 0 : i32
    %c0_i32_0 = arith.constant 0 : i32
    %c0_i32_1 = arith.constant 0 : i32
    return %c0_i32, %c0_i32_0 : i32, i32
  }
}

</mosaic_0001>

<llo_original>
// kernel: tpu_custom_call.1
$region0: #{tpu_custom_call.1}
  #allocation0 [shape = 'u32[]', space=smem, size = 0x4, offset = 0x4, fixed_abs, tag = 'smem constant byte address 0x4 - core index']
  #allocation1 [shape = 'u32[144,128]{1,0:T(1,128)}', space=vmem, size = 0x12000, scoped, tag = 'internal scratch']
  %s0 = inlined_call_operand.vmem [shape: f32[512,36], index: 0, kind: input, shape index: {}]
  %s1 = inlined_call_operand.vmem [shape: f32[36,8], index: 1, kind: input, shape index: {}]
  %s2 = inlined_call_operand.hbm [shape: f32[1,8], index: 2, kind: output, shape index: {0}]
  %s3 = inlined_call_operand.hbm [shape: f32[1,8], index: 3, kind: output, shape index: {1}]
  %4 = xla_tuple %s2, %s3
  %s5 = sld [smem:[#allocation0]]
  $region53: #{tpu_custom_call.1} parent=0
    _
  %s7 = ssub.s32 1, %s5
  %s8 = scalar_select 0, %s7, %s5
  $region1: #{tpu_custom_call.1} parent=0
    #allocation2 [shape = 'u8[512]{0}', space=vmem, size = 0x400, scoped, tag = 'output window, operand 0, single buffered']
    #allocation3 [shape = 's32[2]{0}', space=sflag, size = 0x8, scoped, tag = 'scoped memory for tpu_custom_call.1']
    #allocation4 [shape = 'u8[512]{0}', space=vmem, size = 0x400, scoped, tag = 'output window, operand 1, single buffered']
    #allocation5 [shape = 's32[1]{0}', space=sflag, size = 0x4, scoped, tag = 'scoped memory for tpu_custom_call.1']
    %9 = vsyncpa [#allocation3], 0
    %10 = vsyncpa [#allocation5], 0
    loop: start=0, step=1, limit=6
    $region2: #{tpu_custom_call.1} parent=1 // loop_pre_header
      _
    $region3: #{tpu_custom_call.1} parent=1 // loop_header
      %s12 = sphi 0, %s16
      %p13 = scmp.ge.s32.totalorder %s12, 6
      %s22 = sphi 0, %s24
      %s25 = sphi 0, %s22
      %s26 = sphi 0, %s25
      %s42 = sphi 0, %s26
      %s46 = sphi 0, %s46
      %s48 = sphi 0, %s46
      %s49 = sphi 0, %s48
      %s63 = sphi 0, %s49
      %s67 = sphi 0, %s67
      %s69 = sphi 0, %s67
      %s70 = sphi 0, %s69
      %s84 = sphi 0, %s70
      %s88 = sphi 0, %s88
      %s90 = sphi 0, %s88
      %s91 = sphi 0, %s90
      %s105 = sphi 0, %s91
    $region4: #{tpu_custom_call.1} parent=1 // loop_header_branch
      %15 = sbr.rel (%p13) target = $region8
    $region5: #{tpu_custom_call.1} parent=1 // loop_body
      %s17 = ssub.s32 %s12, 1
      %s18 = ssub.s32 %s12, 2
      %s19 = sadd.s32 %s12, 1
      %s20 = ssub.s32 %s12, %s19
      %p21 = scmp.eq.s32.totalorder %s20, 0
      %s23 = sadd.s32 %s22, 1
      %s24 = scalar_select %p21, %s22, %s23
      %p27 = pneg %p21
      %p28 = scmp.eq.s32.totalorder %s12, 3
      %p29 = por %p27, %p28
      %p30 = scmp.ne.s32.totalorder %s22, %s25
      %p31 = scmp.eq.s32.totalorder %s12, 0
      %p32 = por %p30, %p31
      %p33 = scmp.ne.s32.totalorder %s22, %s25
      %p34 = scmp.eq.s32.totalorder %s17, 3
      %p35 = por %p33, %p34
      %p36 = scmp.ne.s32.totalorder %s25, %s26
      %p37 = scmp.eq.s32.totalorder %s17, 0
      %p38 = por %p36, %p37
      %p39 = scmp.ne.s32.totalorder %s25, %s26
      %p40 = scmp.eq.s32.totalorder %s18, 3
      %p41 = por %p39, %p40
      %p43 = scmp.ne.s32.totalorder %s26, %s42
      %p44 = scmp.eq.s32.totalorder %s18, 0
      %p45 = por %p43, %p44
      %s47 = sadd.s32 %s46, 1
      %p50 = scmp.eq.s32.totalorder %s12, 3
      %p51 = scmp.ne.s32.totalorder %s46, %s48
      %p52 = scmp.eq.s32.totalorder %s12, 0
      %p53 = por %p51, %p52
      %p54 = scmp.ne.s32.totalorder %s46, %s48
      %p55 = scmp.eq.s32.totalorder %s17, 3
      %p56 = por %p54, %p55
      %p57 = scmp.ne.s32.totalorder %s48, %s49
      %p58 = scmp.eq.s32.totalorder %s17, 0
      %p59 = por %p57, %p58
      %p60 = scmp.ne.s32.totalorder %s48, %s49
      %p61 = scmp.eq.s32.totalorder %s18, 3
      %p62 = por %p60, %p61
      %p64 = scmp.ne.s32.totalorder %s49, %s63
      %p65 = scmp.eq.s32.totalorder %s18, 0
      %p66 = por %p64, %p65
      %s68 = sadd.s32 %s67, 1
      %p71 = scmp.eq.s32.totalorder %s12, 3
      %p72 = scmp.ne.s32.totalorder %s67, %s69
      %p73 = scmp.eq.s32.totalorder %s12, 0
      %p74 = por %p72, %p73
      %p75 = scmp.ne.s32.totalorder %s67, %s69
      %p76 = scmp.eq.s32.totalorder %s17, 3
      %p77 = por %p75, %p76
      %p78 = scmp.ne.s32.totalorder %s69, %s70
      %p79 = scmp.eq.s32.totalorder %s17, 0
      %p80 = por %p78, %p79
      %p81 = scmp.ne.s32.totalorder %s69, %s70
      %p82 = scmp.eq.s32.totalorder %s18, 3
      %p83 = por %p81, %p82
      %p85 = scmp.ne.s32.totalorder %s70, %s84
      %p86 = scmp.eq.s32.totalorder %s18, 0
      %p87 = por %p85, %p86
      %s89 = sadd.s32 %s88, 1
      %p92 = scmp.eq.s32.totalorder %s12, 3
      %p93 = scmp.ne.s32.totalorder %s88, %s90
      %p94 = scmp.eq.s32.totalorder %s12, 0
      %p95 = por %p93, %p94
      %p96 = scmp.ne.s32.totalorder %s88, %s90
      %p97 = scmp.eq.s32.totalorder %s17, 3
      %p98 = por %p96, %p97
      %p99 = scmp.ne.s32.totalorder %s90, %s91
      %p100 = scmp.eq.s32.totalorder %s17, 0
      %p101 = por %p99, %p100
      %p102 = scmp.ne.s32.totalorder %s90, %s91
      %p103 = scmp.eq.s32.totalorder %s18, 3
      %p104 = por %p102, %p103
      %p106 = scmp.ne.s32.totalorder %s91, %s105
      %p107 = scmp.eq.s32.totalorder %s18, 0
      %p108 = por %p106, %p107
      %p109 = scmp.le.s32.totalorder 1, %s12
      %p110 = scmp.lt.s32.totalorder %s12, 5
      %p111 = pnand %p109, %p110
      %p112 = pneg %p111
      // Predicated region
      $region9: #{tpu_custom_call.1} parent=5 // pred_check
        _
      $region10: #{tpu_custom_call.1} parent=5 // pred_check_branch
        %114 = sbr.rel (%p111) target = $region12
      $region11: #{tpu_custom_call.1} parent=5 // pred_region
        %s115 = ssub.s32 %s12, 1
        // Predicated region
        $region13: #{tpu_custom_call.1} parent=11 // pred_check
          %p116 = pneg %p59
        $region14: #{tpu_custom_call.1} parent=11 // pred_check_branch
          %118 = sbr.rel (%p116) target = $region16
        $region15: #{tpu_custom_call.1} parent=11 // pred_region
          _
        $region16: #{tpu_custom_call.1} parent=11 // pred_fallthru
          _
      $region12: #{tpu_custom_call.1} parent=5 // pred_fallthru
        _
      %p119 = scmp.lt.s32.totalorder %s12, 4
      // Predicated region
      $region17: #{tpu_custom_call.1} parent=5 // pred_check
        %p120 = pneg %p119
      $region18: #{tpu_custom_call.1} parent=5 // pred_check_branch
        %122 = sbr.rel (%p120) target = $region20
      $region19: #{tpu_custom_call.1} parent=5 // pred_region
        // Predicated region
        $region21: #{tpu_custom_call.1} parent=19 // pred_check
          %p123 = pneg %p32
        $region22: #{tpu_custom_call.1} parent=19 // pred_check_branch
          %125 = sbr.rel (%p123) target = $region24
        $region23: #{tpu_custom_call.1} parent=19 // pred_region
          %s126 = smul.u32 16, %s12
          %p127 = scmp.lt.s32.totalorder %s126, 63
          %s128 = scalar_select %p127, %s126, 63
          %s129 = smul.addr %s128, 8
          %s130 = scalar_lea.vmem %s0, %s129
          %s131 = smul.u32 16, %s12
        $region24: #{tpu_custom_call.1} parent=19 // pred_fallthru
          _
      $region20: #{tpu_custom_call.1} parent=5 // pred_fallthru
        _
      %p132 = scmp.le.s32.totalorder 1, %s12
      %p133 = scmp.lt.s32.totalorder %s12, 5
      %p134 = pnand %p132, %p133
      %p135 = pneg %p134
      // Predicated region
      $region25: #{tpu_custom_call.1} parent=5 // pred_check
        _
      $region26: #{tpu_custom_call.1} parent=5 // pred_check_branch
        %137 = sbr.rel (%p134) target = $region28
      $region27: #{tpu_custom_call.1} parent=5 // pred_region
        %s138 = ssub.s32 %s12, 1
        %s139 = smul.u32 16, %s17
        %p140 = scmp.lt.s32.totalorder %s139, 63
        %s141 = scalar_select %p140, %s139, 63
        %s142 = smul.addr %s141, 8
        %s143 = scalar_lea.vmem %s0, %s142
        %p144 = pneg %p38
        %p145 = pneg %p35
        %p146 = pneg %p59
        %p147 = pneg %p56
        %p148 = pneg %p80
        %p149 = pneg %p77
        %p150 = pneg %p101
        %p151 = pneg %p98
        %s152 = smul.u32 16, %s17
        %p153 = scmp.lt.s32.totalorder %s152, 63
        %s154 = scalar_select %p153, %s152, 63
        %s155 = smul.addr %s154, 8
        %s156 = scalar_lea.vmem %s0, %s155
        %s157 = smul.u32 16, %s17
        %p158 = scmp.eq.s32.totalorder %s17, 0
        // Predicated region
        $region29: #{tpu_custom_call.1} parent=27 // pred_check
          %p159 = pneg %p158
        $region30: #{tpu_custom_call.1} parent=27 // pred_check_branch
          %161 = sbr.rel (%p159) target = $region32
        $region31: #{tpu_custom_call.1} parent=27 // pred_region
          %vm162 = vcmask 57344
          %163 = vst.msk [vmem:[#allocation2] sm:$0x1] %vm162, 0.0
          %164 = vst.msk [vmem:[#allocation4] sm:$0x1] %vm162, 0.0
        $region32: #{tpu_custom_call.1} parent=27 // pred_fallthru
          _
        %v165 = vld [vmem:[%s156] sm:$0xff]
        %v166 = vld [vmem:[%s156 + $0x8] sm:$0xff]
        %v167 = vld [vmem:[%s156 + $0x10] sm:$0xff]
        %v168 = vld [vmem:[%s156 + $0x18] sm:$0xff]
        %v169 = vld [vmem:[%s156 + $0x20] sm:$0xff]
        %v170 = vld [vmem:[%s156 + $0x28] sm:$0xff]
        %v171 = vld [vmem:[%s156 + $0x30] sm:$0xff]
        %v172 = vld [vmem:[%s156 + $0x38] sm:$0xff]
        %v173 = vld [vmem:[%s156 + $0x40] sm:$0xff]
        %v174 = vld [vmem:[%s156 + $0x48] sm:$0xff]
        %v175 = vld [vmem:[%s156 + $0x50] sm:$0xff]
        %v176 = vld [vmem:[%s156 + $0x58] sm:$0xff]
        %v177 = vld [vmem:[%s156 + $0x60] sm:$0xff]
        %v178 = vld [vmem:[%s156 + $0x68] sm:$0xff]
        %v179 = vld [vmem:[%s156 + $0x70] sm:$0xff]
        %v180 = vld [vmem:[%s156 + $0x78] sm:$0xff]
        %v181 = vld [vmem:[%s1] sm:$0xff]
        %v182 = vld [vmem:[%s1 + $0x8] sm:$0xff]
        %v183 = vld [vmem:[%s1 + $0x10] sm:$0xff]
        %v184 = vld [vmem:[%s1 + $0x18] sm:$0xff]
        %v185 = vld [vmem:[%s1 + $0x20] sm:$0xf]
        %vm186 = vcmask 293888
        %v188 = vsel %vm186, %v165, 0
        %v191 = vsel %vm186, %v166, 0
        %v194 = vsel %vm186, %v167, 0
        %v197 = vsel %vm186, %v168, 0
        %v200 = vsel %vm186, %v169, 0
        %v203 = vsel %vm186, %v170, 0
        %v206 = vsel %vm186, %v171, 0
        %v209 = vsel %vm186, %v172, 0
        %v212 = vsel %vm186, %v173, 0
        %v215 = vsel %vm186, %v174, 0
        %v218 = vsel %vm186, %v175, 0
        %v221 = vsel %vm186, %v176, 0
        %v224 = vsel %vm186, %v177, 0
        %v227 = vsel %vm186, %v178, 0
        %v230 = vsel %vm186, %v179, 0
        %v233 = vsel %vm186, %v180, 0
        %vm235 = vcmask 1043456
        %v237 = vsel %vm235, %v185, 0
        %239 = vmatprep.subr.mxu0 0.0
        %240 = vmatpush1.msra.mxu0 %v181
        %241 = vmatprep.subr.mxu0 0.0
        %242 = vmatpush1.msra.mxu0 %v182
        %243 = vmatprep.subr.mxu0 0.0
        %244 = vmatpush1.msra.mxu0 %v183
        %245 = vmatprep.subr.mxu0 0.0
        %246 = vmatpush1.msra.mxu0 %v184
        %247 = vmatprep.subr.mxu0 0.0
        %248 = vmatpush1.msra.mxu0 %v237
        %249 = vmatprep.subr.mxu0 0.0
        %250 = vmatpush1.msra.mxu0 0.0
        %251 = vmatprep.subr.mxu0 0.0
        %252 = vmatpush1.msra.mxu0 0.0
        %253 = vmatprep.subr.mxu0 0.0
        %254 = vmatpush1.msra.mxu0 0.0
        %255 = vmatprep.subr.mxu0 0.0
        %256 = vmatpush1.msra.mxu0 0.0
        %257 = vmatprep.subr.mxu0 0.0
        %258 = vmatpush1.msra.mxu0 0.0
        %259 = vmatprep.subr.mxu0 0.0
        %260 = vmatpush1.msra.mxu0 0.0
        %261 = vmatprep.subr.mxu0 0.0
        %262 = vmatpush1.msra.mxu0 0.0
        %263 = vmatprep.subr.mxu0 0.0
        %264 = vmatpush1.msra.mxu0 0.0
        %265 = vmatprep.subr.mxu0 0.0
        %266 = vmatpush1.msra.mxu0 0.0
        %267 = vmatprep.subr.mxu0 0.0
        %268 = vmatpush1.msra.mxu0 0.0
        %269 = vmatprep.subr.mxu0 0.0
        %270 = vmatpush1.msra.mxu0 0.0
        %271 = vmatprep.subr.mxu0 0.0
        %272 = vmatpush1.msra.mxu0 0.0
        %273 = vmatprep.subr.mxu0 0.0
        %274 = vmatpush1.msra.mxu0 0.0
        %275 = vmatprep.subr.mxu0 0.0
        %276 = vmatpush1.msra.mxu0 0.0
        %277 = vmatprep.subr.mxu0 0.0
        %278 = vmatpush1.msra.mxu0 0.0
        %279 = vmatprep.subr.mxu0 0.0
        %280 = vmatpush1.msra.mxu0 0.0
        %281 = vmatprep.subr.mxu0 0.0
        %282 = vmatpush1.msra.mxu0 0.0
        %283 = vmatprep.subr.mxu0 0.0
        %284 = vmatpush1.msra.mxu0 0.0
        %285 = vmatprep.subr.mxu0 0.0
        %286 = vmatpush1.msra.mxu0 0.0
        %287 = vmatprep.subr.mxu0 0.0
        %288 = vmatpush1.msra.mxu0 0.0
        %289 = vmatprep.subr.mxu0 0.0
        %290 = vmatpush1.msra.mxu0 0.0
        %291 = vmatprep.subr.mxu0 0.0
        %292 = vmatpush1.msra.mxu0 0.0
        %293 = vmatprep.subr.mxu0 0.0
        %294 = vmatpush1.msra.mxu0 0.0
        %295 = vmatprep.subr.mxu0 0.0
        %296 = vmatpush1.msra.mxu0 0.0
        %297 = vmatprep.subr.mxu0 0.0
        %298 = vmatpush1.msra.mxu0 0.0
        %299 = vmatprep.subr.mxu0 0.0
        %300 = vmatpush1.msra.mxu0 0.0
        %301 = vmatprep.subr.mxu0 0.0
        %302 = vmatpush1.msra.mxu0 0.0
        %303 = vmatprep.mubr.f32.mxu0 0.0
        %304 = vmatmul.mubr.f32.gmra.mrb[0].mxu0 %v188
        %v305 = vpop.f32.mrb[0].mxu0
        %v306 = vadd.f32 0.0, %v305
        %v307 = vpop.f32.mrb[0].mxu0
        %308 = vmatprep.mubr.f32.mxu0 0.0
        %309 = vmatmul.mubr.f32.gmra.mrb[0].mxu0 %v191
        %v310 = vpop.f32.mrb[0].mxu0
        %v311 = vadd.f32 0.0, %v310
        %v312 = vpop.f32.mrb[0].mxu0
        %313 = vmatprep.mubr.f32.mxu0 0.0
        %314 = vmatmul.mubr.f32.gmra.mrb[0].mxu0 %v194
        %v315 = vpop.f32.mrb[0].mxu0
        %v316 = vadd.f32 0.0, %v315
        %v317 = vpop.f32.mrb[0].mxu0
        %318 = vmatprep.mubr.f32.mxu0 0.0
        %319 = vmatmul.mubr.f32.gmra.mrb[0].mxu0 %v197
        %v320 = vpop.f32.mrb[0].mxu0
        %v321 = vadd.f32 0.0, %v320
        %v322 = vpop.f32.mrb[0].mxu0
        %323 = vmatprep.mubr.f32.mxu0 0.0
        %324 = vmatmul.mubr.f32.gmra.mrb[0].mxu0 %v200
        %v325 = vpop.f32.mrb[0].mxu0
        %v326 = vadd.f32 0.0, %v325
        %v327 = vpop.f32.mrb[0].mxu0
        %328 = vmatprep.mubr.f32.mxu0 0.0
        %329 = vmatmul.mubr.f32.gmra.mrb[0].mxu0 %v203
        %v330 = vpop.f32.mrb[0].mxu0
        %v331 = vadd.f32 0.0, %v330
        %v332 = vpop.f32.mrb[0].mxu0
        %333 = vmatprep.mubr.f32.mxu0 0.0
        %334 = vmatmul.mubr.f32.gmra.mrb[0].mxu0 %v206
        %v335 = vpop.f32.mrb[0].mxu0
        %v336 = vadd.f32 0.0, %v335
        %v337 = vpop.f32.mrb[0].mxu0
        %338 = vmatprep.mubr.f32.mxu0 0.0
        %339 = vmatmul.mubr.f32.gmra.mrb[0].mxu0 %v209
        %v340 = vpop.f32.mrb[0].mxu0
        %v341 = vadd.f32 0.0, %v340
        %v342 = vpop.f32.mrb[0].mxu0
        %343 = vmatprep.mubr.f32.mxu0 0.0
        %344 = vmatmul.mubr.f32.gmra.mrb[0].mxu0 %v212
        %v345 = vpop.f32.mrb[0].mxu0
        %v346 = vadd.f32 0.0, %v345
        %v347 = vpop.f32.mrb[0].mxu0
        %348 = vmatprep.mubr.f32.mxu0 0.0
        %349 = vmatmul.mubr.f32.gmra.mrb[0].mxu0 %v215
        %v350 = vpop.f32.mrb[0].mxu0
        %v351 = vadd.f32 0.0, %v350
        %v352 = vpop.f32.mrb[0].mxu0
        %353 = vmatprep.mubr.f32.mxu0 0.0
        %354 = vmatmul.mubr.f32.gmra.mrb[0].mxu0 %v218
        %v355 = vpop.f32.mrb[0].mxu0
        %v356 = vadd.f32 0.0, %v355
        %v357 = vpop.f32.mrb[0].mxu0
        %358 = vmatprep.mubr.f32.mxu0 0.0
        %359 = vmatmul.mubr.f32.gmra.mrb[0].mxu0 %v221
        %v360 = vpop.f32.mrb[0].mxu0
        %v361 = vadd.f32 0.0, %v360
        %v362 = vpop.f32.mrb[0].mxu0
        %363 = vmatprep.mubr.f32.mxu0 0.0
        %364 = vmatmul.mubr.f32.gmra.mrb[0].mxu0 %v224
        %v365 = vpop.f32.mrb[0].mxu0
        %v366 = vadd.f32 0.0, %v365
        %v367 = vpop.f32.mrb[0].mxu0
        %368 = vmatprep.mubr.f32.mxu0 0.0
        %369 = vmatmul.mubr.f32.gmra.mrb[0].mxu0 %v227
        %v370 = vpop.f32.mrb[0].mxu0
        %v371 = vadd.f32 0.0, %v370
        %v372 = vpop.f32.mrb[0].mxu0
        %373 = vmatprep.mubr.f32.mxu0 0.0
        %374 = vmatmul.mubr.f32.gmra.mrb[0].mxu0 %v230
        %v375 = vpop.f32.mrb[0].mxu0
        %v376 = vadd.f32 0.0, %v375
        %v377 = vpop.f32.mrb[0].mxu0
        %378 = vmatprep.mubr.f32.mxu0 0.0
        %379 = vmatmul.mubr.f32.gmra.mrb[0].mxu0 %v233
        %v380 = vpop.f32.mrb[0].mxu0
        %v381 = vadd.f32 0.0, %v380
        %v382 = vpop.f32.mrb[0].mxu0
        %383 = vdwg.mxu0
        %v384 = vld [vmem:[#allocation2] sm:$0x1]
        %vm385 = vcmask 64512
        %v386 = vsel %vm385, %v306, 0.0
        %v387 = vsel %vm385, %v311, 0.0
        %v388 = vadd.f32 %v386, %v387
        %v389 = vsel %vm385, %v316, 0.0
        %v390 = vadd.f32 %v388, %v389
        %v391 = vsel %vm385, %v321, 0.0
        %v392 = vadd.f32 %v390, %v391
        %v393 = vsel %vm385, %v326, 0.0
        %v394 = vadd.f32 %v392, %v393
        %v395 = vsel %vm385, %v331, 0.0
        %v396 = vadd.f32 %v394, %v395
        %v397 = vsel %vm385, %v336, 0.0
        %v398 = vadd.f32 %v396, %v397
        %v399 = vsel %vm385, %v341, 0.0
        %v400 = vadd.f32 %v398, %v399
        %v401 = vsel %vm385, %v346, 0.0
        %v402 = vadd.f32 %v400, %v401
        %v403 = vsel %vm385, %v351, 0.0
        %v404 = vadd.f32 %v402, %v403
        %v405 = vsel %vm385, %v356, 0.0
        %v406 = vadd.f32 %v404, %v405
        %v407 = vsel %vm385, %v361, 0.0
        %v408 = vadd.f32 %v406, %v407
        %v409 = vsel %vm385, %v366, 0.0
        %v410 = vadd.f32 %v408, %v409
        %v411 = vsel %vm385, %v371, 0.0
        %v412 = vadd.f32 %v410, %v411
        %v413 = vsel %vm385, %v376, 0.0
        %v414 = vadd.f32 %v412, %v413
        %v415 = vsel %vm385, %v381, 0.0
        %v416 = vadd.f32 %v414, %v415
        %v417 = vrot.slane %v416, 4
        %v418 = vadd.f32 %v416, %v417
        %v419 = vrot.slane %v418, 2
        %v420 = vadd.f32 %v418, %v419
        %v421 = vrot.slane %v420, 1
        %v422 = vadd.f32 %v420, %v421
        %v423 = vadd.f32 %v384, %v422
        %vm424 = vcmask 57344
        %425 = vst.msk [vmem:[#allocation2] sm:$0x1] %vm424, %v423
        %v426 = vld [vmem:[#allocation4] sm:$0x1]
        %v427 = vmul.f32 %v306, %v306
        %v428 = vmul.f32 %v311, %v311
        %v429 = vmul.f32 %v316, %v316
        %v430 = vmul.f32 %v321, %v321
        %v431 = vmul.f32 %v326, %v326
        %v432 = vmul.f32 %v331, %v331
        %v433 = vmul.f32 %v336, %v336
        %v434 = vmul.f32 %v341, %v341
        %v435 = vmul.f32 %v346, %v346
        %v436 = vmul.f32 %v351, %v351
        %v437 = vmul.f32 %v356, %v356
        %v438 = vmul.f32 %v361, %v361
        %v439 = vmul.f32 %v366, %v366
        %v440 = vmul.f32 %v371, %v371
        %v441 = vmul.f32 %v376, %v376
        %v442 = vmul.f32 %v381, %v381
        %v443 = vsel %vm385, %v427, 0.0
        %v444 = vsel %vm385, %v428, 0.0
        %v445 = vadd.f32 %v443, %v444
        %v446 = vsel %vm385, %v429, 0.0
        %v447 = vadd.f32 %v445, %v446
        %v448 = vsel %vm385, %v430, 0.0
        %v449 = vadd.f32 %v447, %v448
        %v450 = vsel %vm385, %v431, 0.0
        %v451 = vadd.f32 %v449, %v450
        %v452 = vsel %vm385, %v432, 0.0
        %v453 = vadd.f32 %v451, %v452
        %v454 = vsel %vm385, %v433, 0.0
        %v455 = vadd.f32 %v453, %v454
        %v456 = vsel %vm385, %v434, 0.0
        %v457 = vadd.f32 %v455, %v456
        %v458 = vsel %vm385, %v435, 0.0
        %v459 = vadd.f32 %v457, %v458
        %v460 = vsel %vm385, %v436, 0.0
        %v461 = vadd.f32 %v459, %v460
        %v462 = vsel %vm385, %v437, 0.0
        %v463 = vadd.f32 %v461, %v462
        %v464 = vsel %vm385, %v438, 0.0
        %v465 = vadd.f32 %v463, %v464
        %v466 = vsel %vm385, %v439, 0.0
        %v467 = vadd.f32 %v465, %v466
        %v468 = vsel %vm385, %v440, 0.0
        %v469 = vadd.f32 %v467, %v468
        %v470 = vsel %vm385, %v441, 0.0
        %v471 = vadd.f32 %v469, %v470
        %v472 = vsel %vm385, %v442, 0.0
        %v473 = vadd.f32 %v471, %v472
        %v474 = vrot.slane %v473, 4
        %v475 = vadd.f32 %v473, %v474
        %v476 = vrot.slane %v475, 2
        %v477 = vadd.f32 %v475, %v476
        %v478 = vrot.slane %v477, 1
        %v479 = vadd.f32 %v477, %v478
        %v480 = vadd.f32 %v426, %v479
        %481 = vst.msk [vmem:[#allocation4] sm:$0x1] %vm424, %v480
        // Predicated region
        $region33: #{tpu_custom_call.1} parent=27 // pred_check
          %p482 = pneg %p77
        $region34: #{tpu_custom_call.1} parent=27 // pred_check_branch
          %484 = sbr.rel (%p482) target = $region36
        $region35: #{tpu_custom_call.1} parent=27 // pred_region
          %s486 = ssub.s32 16, 16
          %487 = vsyncadd [#allocation3], %s486
          %s489 = sshll.u32 [#allocation2], 4
          %s490 = int_to_ptr.vmem [resolvable:$true] %s489
          %492 = dma.vmem_to_hbm [thread:$0]  %s490, 16, %s2, [#allocation3]
        $region36: #{tpu_custom_call.1} parent=27 // pred_fallthru
          _
        // Predicated region
        $region37: #{tpu_custom_call.1} parent=27 // pred_check
          %p493 = pneg %p98
        $region38: #{tpu_custom_call.1} parent=27 // pred_check_branch
          %495 = sbr.rel (%p493) target = $region40
        $region39: #{tpu_custom_call.1} parent=27 // pred_region
          %s497 = ssub.s32 16, 16
          %498 = vsyncadd [#allocation5], %s497
          %s500 = sshll.u32 [#allocation4], 4
          %s501 = int_to_ptr.vmem [resolvable:$true] %s500
          %503 = dma.vmem_to_hbm [thread:$0]  %s501, 16, %s3, [#allocation5]
        $region40: #{tpu_custom_call.1} parent=27 // pred_fallthru
          _
        // Predicated region
        $region41: #{tpu_custom_call.1} parent=27 // pred_check
          %p504 = pneg %p77
        $region42: #{tpu_custom_call.1} parent=27 // pred_check_branch
          %506 = sbr.rel (%p504) target = $region44
        $region43: #{tpu_custom_call.1} parent=27 // pred_region
          %507 = dma.done [#allocation3], 16
        $region44: #{tpu_custom_call.1} parent=27 // pred_fallthru
          _
        // Predicated region
        $region45: #{tpu_custom_call.1} parent=27 // pred_check
          %p508 = pneg %p98
        $region46: #{tpu_custom_call.1} parent=27 // pred_check_branch
          %510 = sbr.rel (%p508) target = $region48
        $region47: #{tpu_custom_call.1} parent=27 // pred_region
          %511 = dma.done [#allocation5], 16
        $region48: #{tpu_custom_call.1} parent=27 // pred_fallthru
          _
      $region28: #{tpu_custom_call.1} parent=5 // pred_fallthru
        _
      %p512 = scmp.le.s32.totalorder 2, %s12
      // Predicated region
      $region49: #{tpu_custom_call.1} parent=5 // pred_check
        %p513 = pneg %p512
      $region50: #{tpu_custom_call.1} parent=5 // pred_check_branch
        %515 = sbr.rel (%p513) target = $region52
      $region51: #{tpu_custom_call.1} parent=5 // pred_region
        %s516 = ssub.s32 %s12, 2
      $region52: #{tpu_custom_call.1} parent=5 // pred_fallthru
        _
    $region6: #{tpu_custom_call.1} parent=1 // loop_footer
      %s16 = sadd.s32 1, %s12
    $region7: #{tpu_custom_call.1} parent=1 // loop_footer_branch
      %11 = sbr.rel target = $region3
    $region8: #{tpu_custom_call.1} parent=1 // loop_exit
      _
    %517 = vsyncpa [#allocation3], 1
    %s518 = scalar_lea.sflag [#allocation3], 1
    %519 = vsyncpa %s518, 1
    %520 = vsyncpa [#allocation5], 1

</llo_original>
